<compile_context>
chip_gen: v7x
topology: tpu7x:2x2x1
jax: 0.10.0
libtpu: 0.0.40
codegen_flags: <defaults>
</compile_context>

<pallas_src>
import jax
import jax.numpy as jnp
from jax import lax
from jax.experimental import pallas as pl
from jax.experimental.pallas import tpu as pltpu

INV_SCALE_FACTOR = 0.1            # qk.div(0.1)
SCALE = 1.0 / INV_SCALE_FACTOR    # == 10.0


def _attn_kernel(x1_ref, x2_ref, o_ref):
    # Full arrays resident in VMEM (single invocation, grid=()):
    #   x1_ref: (B, M, D), x2_ref: (B, N, D), o_ref: (B, M, D)
    q = x1_ref[...]                          # (B, M, D)
    k = x2_ref[...]                          # (B, N, D)

    # qk = x1 @ x2^T without materializing the transpose: contract the shared
    # D axis on the MXU via dot_general, batched over B. f32 accumulation.
    qk = lax.dot_general(
        q, k,
        dimension_numbers=(((2,), (2,)), ((0,), (0,))),
        preferred_element_type=jnp.float32,
    )                                        # (B, M, N) f32

    # Numerically-stable softmax of (SCALE * qk) along the last axis.
    # The positive scale is folded into the exp argument (max is
    # scale-invariant), so only the B*M*N logits get one extra VPU mul.
    m = jnp.max(qk, axis=-1, keepdims=True)
    e = jnp.exp((qk - m) * SCALE)
    denom = jnp.sum(e, axis=-1, keepdims=True)
    # Exact divide: only B*M denominator rows, so the approx (EUP) reciprocal
    # buys nothing here and would cost numerical parity.
    sm = e / denom

    # TODO(synk): nn.Dropout(p=0.1) is treated as eval-mode identity; training
    # parity would need pltpu.prng_seed + pltpu.prng_random_bits masking with
    # 1/(1-p) rescaling.

    # output = softmax(...) @ x2 ; cast sm to the operand dtype so the second
    # MXU op stays on the fast path for bf16 inputs (accumulation stays f32).
    out = lax.dot_general(
        sm.astype(k.dtype), k,
        dimension_numbers=(((2,), (1,)), ((0,), (0,))),
        preferred_element_type=jnp.float32,
    )                                        # (B, M, D) f32
    o_ref[...] = out.astype(o_ref.dtype)


def model_forward(x1, x2):
    """x1: (B, M, D), x2: (B, N, D) -> (B, M, D)"""
    B, M, D = x1.shape
    B2, N, D2 = x2.shape
    assert B == B2 and D == D2, "batch / feature dims must match"

    itemsize = jnp.dtype(x1.dtype).itemsize
    cost = pl.CostEstimate(
        flops=4 * B * M * N * D,              # two batched matmuls
        transcendentals=B * M * N,            # exp in softmax
        bytes_accessed=(x1.size + x2.size + B * M * D) * itemsize,
    )

    return pl.pallas_call(
        _attn_kernel,
        out_shape=jax.ShapeDtypeStruct((B, M, D), x1.dtype),
        in_specs=[
            pl.BlockSpec(memory_space=pltpu.MemorySpace.VMEM),
            pl.BlockSpec(memory_space=pltpu.MemorySpace.VMEM),
        ],
        out_specs=pl.BlockSpec(memory_space=pltpu.MemorySpace.VMEM),
        cost_estimate=cost,
    )(x1, x2)


def model_forward_ref(x1, x2):
    # HIGHEST precision so the f32 reference matmuls match the kernel's
    # f32-accumulated MXU path as closely as possible.
    qk = jnp.einsum("bmd,bnd->bmn", x1, x2, precision=lax.Precision.HIGHEST)
    scaled = qk / INV_SCALE_FACTOR
    sm = jax.nn.softmax(scaled, axis=-1)
    return jnp.einsum("bmn,bnd->bmd", sm, x2, precision=lax.Precision.HIGHEST)


if __name__ == "__main__":
    # Small, consistent shapes: batch=2, M=8 queries, N=16 keys/values, D=32.
    key = jax.random.PRNGKey(0)
    k1, k2 = jax.random.split(key)
    x1 = jax.random.normal(k1, (2, 8, 32), dtype=jnp.float32)
    x2 = jax.random.normal(k2, (2, 16, 32), dtype=jnp.float32)

    out = model_forward(x1, x2)
    out = jax.block_until_ready(out)

    ref = model_forward_ref(x1, x2)
    assert out.shape == (2, 8, 32)
    # Exact-divide softmax: tolerance now only covers f32 matmul accumulation-
    # order differences between the MXU path and the XLA reference.
    assert jnp.allclose(out, ref, atol=2e-3, rtol=2e-3), "mismatch vs reference"

    print("KERNEL_OK")
</pallas_src>

<mosaic_0001>
module attributes {stable_mosaic.version = 11 : i64} {
  func.func @_attn_kernel(%arg0: memref<2x8x32xf32, #tpu.memory_space<vmem>>, %arg1: memref<2x16x32xf32, #tpu.memory_space<vmem>>, %arg2: memref<2x8x32xf32, #tpu.memory_space<vmem>>) attributes {dimension_semantics = [], scalar_prefetch = 0 : i64, scratch_operands = 0 : i64, tpu.core_type = #tpu.core_type<tc>} {
    %c0 = arith.constant 0 : index
    %c0_0 = arith.constant 0 : index
    %c0_1 = arith.constant 0 : index
    %0 = vector.load %arg0[%c0, %c0_0, %c0_1] : memref<2x8x32xf32, #tpu.memory_space<vmem>>, vector<2x8x32xf32>
    %c0_2 = arith.constant 0 : index
    %c0_3 = arith.constant 0 : index
    %c0_4 = arith.constant 0 : index
    %1 = vector.load %arg1[%c0_2, %c0_3, %c0_4] : memref<2x16x32xf32, #tpu.memory_space<vmem>>, vector<2x16x32xf32>
    %cst = arith.constant dense<0.000000e+00> : vector<2x8x16xf32>
    %2 = tpu.matmul %0, %1, %cst {dimension_numbers = #tpu.dot_dimension_numbers<[2], [2], [1], [1], [0, 0, 0, 1, 1, 1], [0], [0]>} : vector<2x8x32xf32>, vector<2x16x32xf32>, vector<2x8x16xf32> -> vector<2x8x16xf32>
    %cst_5 = arith.constant dense<0xFF800000> : vector<2x8xf32>
    %3 = vector.multi_reduction <maximumf>, %2, %cst_5 [2] : vector<2x8x16xf32> to vector<2x8xf32>
    %4 = vector.shape_cast %3 : vector<2x8xf32> to vector<2x8x1xf32>
    %5 = vector.broadcast %4 : vector<2x8x1xf32> to vector<2x8x16xf32>
    %6 = arith.subf %2, %5 : vector<2x8x16xf32>
    %cst_6 = arith.constant 1.000000e+01 : f32
    %7 = vector.broadcast %cst_6 : f32 to vector<2x8x16xf32>
    %8 = arith.mulf %6, %7 : vector<2x8x16xf32>
    %9 = math.exp %8 : vector<2x8x16xf32>
    %cst_7 = arith.constant dense<0.000000e+00> : vector<2x8xf32>
    %10 = vector.multi_reduction <add>, %9, %cst_7 [2] : vector<2x8x16xf32> to vector<2x8xf32>
    %11 = vector.shape_cast %10 : vector<2x8xf32> to vector<2x8x1xf32>
    %12 = vector.broadcast %11 : vector<2x8x1xf32> to vector<2x8x16xf32>
    %13 = arith.divf %9, %12 : vector<2x8x16xf32>
    %cst_8 = arith.constant dense<0.000000e+00> : vector<2x8x32xf32>
    %14 = tpu.matmul %13, %1, %cst_8 {dimension_numbers = #tpu.dot_dimension_numbers<[2], [1], [1], [2], [0, 0, 0, 1, 1, 2], [0], [0]>} : vector<2x8x16xf32>, vector<2x16x32xf32>, vector<2x8x32xf32> -> vector<2x8x32xf32>
    %c0_9 = arith.constant 0 : index
    %c0_10 = arith.constant 0 : index
    %c0_11 = arith.constant 0 : index
    %15 = vector.load %arg2[%c0_9, %c0_10, %c0_11] : memref<2x8x32xf32, #tpu.memory_space<vmem>>, vector<2x8x32xf32>
    tpu.vector_store %arg2[%c0_9, %c0_10, %c0_11], %14 {strides = array<i32>} : memref<2x8x32xf32, #tpu.memory_space<vmem>>, vector<2x8x32xf32>,
    return
  }
}

</mosaic_0001>

<llo_original>
// kernel: tpu_custom_call.1
$region0: #{tpu_custom_call.1}
  #allocation0 [shape = 'u32[]', space=smem, size = 0x4, offset = 0x4, fixed_abs, tag = 'smem constant byte address 0x4 - core index']
  #allocation1 [shape = 'u32[144,128]{1,0:T(1,128)}', space=vmem, size = 0x12000, scoped, tag = 'internal scratch']
  %s0 = inlined_call_operand.hbm [shape: f32[2,8,32], index: 0, kind: input, shape index: {}]
  %s1 = inlined_call_operand.hbm [shape: f32[2,16,32], index: 1, kind: input, shape index: {}]
  %s2 = inlined_call_operand.hbm [shape: f32[2,8,32], index: 2, kind: output, shape index: {}]
  %s3 = sld [smem:[#allocation0]]
  $region26: #{tpu_custom_call.1} parent=0
    _
  %s5 = ssub.s32 1, %s3
  %s6 = scalar_select 0, %s5, %s3
  $region1: #{tpu_custom_call.1} parent=0
    #allocation2 [shape = 'u8[8192]{0}', space=vmem, size = 0x2000, scoped, tag = 'input window, operand 0, single buffered']
    #allocation3 [shape = 's32[1]{0}', space=sflag, size = 0x4, scoped, tag = 'scoped memory for tpu_custom_call.1']
    #allocation4 [shape = 's32[1]{0}', space=sflag, size = 0x4, scoped, tag = 'scoped memory for tpu_custom_call.1']
    #allocation5 [shape = 'u8[16384]{0}', space=vmem, size = 0x4000, scoped, tag = 'input window, operand 1, single buffered']
    #allocation6 [shape = 's32[1]{0}', space=sflag, size = 0x4, scoped, tag = 'scoped memory for tpu_custom_call.1']
    #allocation7 [shape = 'u8[8192]{0}', space=vmem, size = 0x2000, scoped, tag = 'output window, operand 0, single buffered']
    %7 = vsyncpa [#allocation3], 0
    %8 = vsyncpa [#allocation6], 0
    %9 = vsyncpa [#allocation4], 0
    // Predicated region
    $region2: #{tpu_custom_call.1} parent=1 // pred_check
      _
    $region3: #{tpu_custom_call.1} parent=1 // pred_check_branch
      %11 = sbr.rel (0) target = $region5
    $region4: #{tpu_custom_call.1} parent=1 // pred_region
      %s13 = ssub.s32 256, 256
      %14 = vsyncadd [#allocation3], %s13
      %s15 = sshll.u32 [#allocation2], 4
      %s16 = int_to_ptr.vmem [resolvable:$true] %s15
      %21 = dma.hbm_to_vmem [thread:$0]  %s0, 256, %s16, [#allocation3], 128, 128, 8
    $region5: #{tpu_custom_call.1} parent=1 // pred_fallthru
      _
    // Predicated region
    $region6: #{tpu_custom_call.1} parent=1 // pred_check
      _
    $region7: #{tpu_custom_call.1} parent=1 // pred_check_branch
      %23 = sbr.rel (0) target = $region9
    $region8: #{tpu_custom_call.1} parent=1 // pred_region
      %s25 = ssub.s32 512, 512
      %26 = vsyncadd [#allocation6], %s25
      %s27 = sshll.u32 [#allocation5], 4
      %s28 = int_to_ptr.vmem [resolvable:$true] %s27
      %33 = dma.hbm_to_vmem [thread:$0]  %s1, 512, %s28, [#allocation6], 128, 128, 8
    $region9: #{tpu_custom_call.1} parent=1 // pred_fallthru
      _
    // Predicated region
    $region10: #{tpu_custom_call.1} parent=1 // pred_check
      _
    $region11: #{tpu_custom_call.1} parent=1 // pred_check_branch
      %35 = sbr.rel (0) target = $region13
    $region12: #{tpu_custom_call.1} parent=1 // pred_region
      %36 = dma.done [#allocation3], 256
    $region13: #{tpu_custom_call.1} parent=1 // pred_fallthru
      _
    // Predicated region
    $region14: #{tpu_custom_call.1} parent=1 // pred_check
      _
    $region15: #{tpu_custom_call.1} parent=1 // pred_check_branch
      %38 = sbr.rel (0) target = $region17
    $region16: #{tpu_custom_call.1} parent=1 // pred_region
      %39 = dma.done [#allocation6], 512
    $region17: #{tpu_custom_call.1} parent=1 // pred_fallthru
      _
    %v40 = vld [vmem:[#allocation2] sm:$0xff]
    %v41 = vld [vmem:[#allocation2 + $0x8] sm:$0xff]
    %v42 = vld [vmem:[#allocation5] sm:$0xff]
    %v43 = vld [vmem:[#allocation5 + $0x8] sm:$0xff]
    %v44 = vld [vmem:[#allocation5 + $0x10] sm:$0xff]
    %v45 = vld [vmem:[#allocation5 + $0x18] sm:$0xff]
    %vm46 = vcmask 261120
    %v48 = vsel %vm46, %v40, 0
    %v51 = vsel %vm46, %v42, 0
    %v54 = vsel %vm46, %v43, 0
    %56 = vmatprep.subr.mxu0 0.0
    %57 = vmatpush1.xpose.msra.mxu0 %v51
    %58 = vmatprep.subr.mxu0 0.0
    %59 = vmatpush1.xpose.msra.mxu0 %v54
    %60 = vmatprep.subr.mxu0 0.0
    %61 = vmatpush1.xpose.msra.mxu0 0.0
    %62 = vmatprep.subr.mxu0 0.0
    %63 = vmatpush1.xpose.msra.mxu0 0.0
    %64 = vmatprep.subr.mxu0 0.0
    %65 = vmatpush1.xpose.msra.mxu0 0.0
    %66 = vmatprep.subr.mxu0 0.0
    %67 = vmatpush1.xpose.msra.mxu0 0.0
    %68 = vmatprep.subr.mxu0 0.0
    %69 = vmatpush1.xpose.msra.mxu0 0.0
    %70 = vmatprep.subr.mxu0 0.0
    %71 = vmatpush1.xpose.msra.mxu0 0.0
    %72 = vmatprep.subr.mxu0 0.0
    %73 = vmatpush1.xpose.msra.mxu0 0.0
    %74 = vmatprep.subr.mxu0 0.0
    %75 = vmatpush1.xpose.msra.mxu0 0.0
    %76 = vmatprep.subr.mxu0 0.0
    %77 = vmatpush1.xpose.msra.mxu0 0.0
    %78 = vmatprep.subr.mxu0 0.0
    %79 = vmatpush1.xpose.msra.mxu0 0.0
    %80 = vmatprep.subr.mxu0 0.0
    %81 = vmatpush1.xpose.msra.mxu0 0.0
    %82 = vmatprep.subr.mxu0 0.0
    %83 = vmatpush1.xpose.msra.mxu0 0.0
    %84 = vmatprep.subr.mxu0 0.0
    %85 = vmatpush1.xpose.msra.mxu0 0.0
    %86 = vmatprep.subr.mxu0 0.0
    %87 = vmatpush1.xpose.msra.mxu0 0.0
    %88 = vmatprep.subr.mxu0 0.0
    %89 = vmatpush1.xpose.msra.mxu0 0.0
    %90 = vmatprep.subr.mxu0 0.0
    %91 = vmatpush1.xpose.msra.mxu0 0.0
    %92 = vmatprep.subr.mxu0 0.0
    %93 = vmatpush1.xpose.msra.mxu0 0.0
    %94 = vmatprep.subr.mxu0 0.0
    %95 = vmatpush1.xpose.msra.mxu0 0.0
    %96 = vmatprep.subr.mxu0 0.0
    %97 = vmatpush1.xpose.msra.mxu0 0.0
    %98 = vmatprep.subr.mxu0 0.0
    %99 = vmatpush1.xpose.msra.mxu0 0.0
    %100 = vmatprep.subr.mxu0 0.0
    %101 = vmatpush1.xpose.msra.mxu0 0.0
    %102 = vmatprep.subr.mxu0 0.0
    %103 = vmatpush1.xpose.msra.mxu0 0.0
    %104 = vmatprep.subr.mxu0 0.0
    %105 = vmatpush1.xpose.msra.mxu0 0.0
    %106 = vmatprep.subr.mxu0 0.0
    %107 = vmatpush1.xpose.msra.mxu0 0.0
    %108 = vmatprep.subr.mxu0 0.0
    %109 = vmatpush1.xpose.msra.mxu0 0.0
    %110 = vmatprep.subr.mxu0 0.0
    %111 = vmatpush1.xpose.msra.mxu0 0.0
    %112 = vmatprep.subr.mxu0 0.0
    %113 = vmatpush1.xpose.msra.mxu0 0.0
    %114 = vmatprep.subr.mxu0 0.0
    %115 = vmatpush1.xpose.msra.mxu0 0.0
    %116 = vmatprep.subr.mxu0 0.0
    %117 = vmatpush1.xpose.msra.mxu0 0.0
    %118 = vmatprep.subr.mxu0 0.0
    %119 = vmatpush1.xpose.msra.mxu0 0.0
    %120 = vmatprep.mubr.f32.mxu0 0.0
    %121 = vmatmul.mubr.f32.gmra.mrb[0].mxu0 %v48
    %v122 = vpop.f32.mrb[0].mxu0
    %v123 = vadd.f32 0.0, %v122
    %v124 = vpop.f32.mrb[0].mxu0
    %125 = vdwg.mxu0
    %v127 = vsel %vm46, %v41, 0
    %v130 = vsel %vm46, %v44, 0
    %v133 = vsel %vm46, %v45, 0
    %135 = vmatprep.subr.mxu0 0.0
    %136 = vmatpush1.xpose.msra.mxu0 %v130
    %137 = vmatprep.subr.mxu0 0.0
    %138 = vmatpush1.xpose.msra.mxu0 %v133
    %139 = vmatprep.subr.mxu0 0.0
    %140 = vmatpush1.xpose.msra.mxu0 0.0
    %141 = vmatprep.subr.mxu0 0.0
    %142 = vmatpush1.xpose.msra.mxu0 0.0
    %143 = vmatprep.subr.mxu0 0.0
    %144 = vmatpush1.xpose.msra.mxu0 0.0
    %145 = vmatprep.subr.mxu0 0.0
    %146 = vmatpush1.xpose.msra.mxu0 0.0
    %147 = vmatprep.subr.mxu0 0.0
    %148 = vmatpush1.xpose.msra.mxu0 0.0
    %149 = vmatprep.subr.mxu0 0.0
    %150 = vmatpush1.xpose.msra.mxu0 0.0
    %151 = vmatprep.subr.mxu0 0.0
    %152 = vmatpush1.xpose.msra.mxu0 0.0
    %153 = vmatprep.subr.mxu0 0.0
    %154 = vmatpush1.xpose.msra.mxu0 0.0
    %155 = vmatprep.subr.mxu0 0.0
    %156 = vmatpush1.xpose.msra.mxu0 0.0
    %157 = vmatprep.subr.mxu0 0.0
    %158 = vmatpush1.xpose.msra.mxu0 0.0
    %159 = vmatprep.subr.mxu0 0.0
    %160 = vmatpush1.xpose.msra.mxu0 0.0
    %161 = vmatprep.subr.mxu0 0.0
    %162 = vmatpush1.xpose.msra.mxu0 0.0
    %163 = vmatprep.subr.mxu0 0.0
    %164 = vmatpush1.xpose.msra.mxu0 0.0
    %165 = vmatprep.subr.mxu0 0.0
    %166 = vmatpush1.xpose.msra.mxu0 0.0
    %167 = vmatprep.subr.mxu0 0.0
    %168 = vmatpush1.xpose.msra.mxu0 0.0
    %169 = vmatprep.subr.mxu0 0.0
    %170 = vmatpush1.xpose.msra.mxu0 0.0
    %171 = vmatprep.subr.mxu0 0.0
    %172 = vmatpush1.xpose.msra.mxu0 0.0
    %173 = vmatprep.subr.mxu0 0.0
    %174 = vmatpush1.xpose.msra.mxu0 0.0
    %175 = vmatprep.subr.mxu0 0.0
    %176 = vmatpush1.xpose.msra.mxu0 0.0
    %177 = vmatprep.subr.mxu0 0.0
    %178 = vmatpush1.xpose.msra.mxu0 0.0
    %179 = vmatprep.subr.mxu0 0.0
    %180 = vmatpush1.xpose.msra.mxu0 0.0
    %181 = vmatprep.subr.mxu0 0.0
    %182 = vmatpush1.xpose.msra.mxu0 0.0
    %183 = vmatprep.subr.mxu0 0.0
    %184 = vmatpush1.xpose.msra.mxu0 0.0
    %185 = vmatprep.subr.mxu0 0.0
    %186 = vmatpush1.xpose.msra.mxu0 0.0
    %187 = vmatprep.subr.mxu0 0.0
    %188 = vmatpush1.xpose.msra.mxu0 0.0
    %189 = vmatprep.subr.mxu0 0.0
    %190 = vmatpush1.xpose.msra.mxu0 0.0
    %191 = vmatprep.subr.mxu0 0.0
    %192 = vmatpush1.xpose.msra.mxu0 0.0
    %193 = vmatprep.subr.mxu0 0.0
    %194 = vmatpush1.xpose.msra.mxu0 0.0
    %195 = vmatprep.subr.mxu0 0.0
    %196 = vmatpush1.xpose.msra.mxu0 0.0
    %197 = vmatprep.subr.mxu0 0.0
    %198 = vmatpush1.xpose.msra.mxu0 0.0
    %199 = vmatprep.mubr.f32.mxu0 0.0
    %200 = vmatmul.mubr.f32.gmra.mrb[0].mxu0 %v127
    %v201 = vpop.f32.mrb[0].mxu0
    %v202 = vadd.f32 0.0, %v201
    %v203 = vpop.f32.mrb[0].mxu0
    %204 = vdwg.mxu0
    %vm205 = vcmask 130048
    %v206 = vsel %vm205, %v123, -inf
    %207 = vmax.xlane.f32.xlu0 %v206
    %v208 = vpop.xlane.xlu0 %207
    %v209 = vsel %vm205, %v202, -inf
    %210 = vmax.xlane.f32.xlu0 %v209
    %v211 = vpop.xlane.xlu0 %210
    %v212 = vsub.f32 %v123, %v208
    %v213 = vsub.f32 %v202, %v211
    %v214 = vmul.f32 %v212, 10.0
    %v215 = vmul.f32 %v213, 10.0
    %v216 = vmul.f32 %v214, 1.442695
    %v217 = vpow.pop %v216
    %v218 = vmul.f32 %v215, 1.442695
    %v219 = vpow.pop %v218
    %v220 = vsel %vm205, %v217, 0.0
    %221 = vadd.xlane.f32.xlu0 %v220
    %v222 = vpop.xlane.xlu0 %221
    %v223 = vsel %vm205, %v219, 0.0
    %224 = vadd.xlane.f32.xlu0 %v223
    %v225 = vpop.xlane.xlu0 %224
    %v226 = vrcp.pop %v222
    %v227 = vmul.f32 %v217, %v226
    %v228 = vrcp.pop %v225
    %v229 = vmul.f32 %v219, %v228
    %v231 = vsel %vm205, %v227, 0
    %233 = vmatprep.subr.mxu0 0.0
    %234 = vmatpush1.msra.mxu0 %v42
    %235 = vmatprep.subr.mxu0 0.0
    %236 = vmatpush1.msra.mxu0 %v43
    %237 = vmatprep.subr.mxu0 0.0
    %238 = vmatpush1.msra.mxu0 0.0
    %239 = vmatprep.subr.mxu0 0.0
    %240 = vmatpush1.msra.mxu0 0.0
    %241 = vmatprep.subr.mxu0 0.0
    %242 = vmatpush1.msra.mxu0 0.0
    %243 = vmatprep.subr.mxu0 0.0
    %244 = vmatpush1.msra.mxu0 0.0
    %245 = vmatprep.subr.mxu0 0.0
    %246 = vmatpush1.msra.mxu0 0.0
    %247 = vmatprep.subr.mxu0 0.0
    %248 = vmatpush1.msra.mxu0 0.0
    %249 = vmatprep.subr.mxu0 0.0
    %250 = vmatpush1.msra.mxu0 0.0
    %251 = vmatprep.subr.mxu0 0.0
    %252 = vmatpush1.msra.mxu0 0.0
    %253 = vmatprep.subr.mxu0 0.0
    %254 = vmatpush1.msra.mxu0 0.0
    %255 = vmatprep.subr.mxu0 0.0
    %256 = vmatpush1.msra.mxu0 0.0
    %257 = vmatprep.subr.mxu0 0.0
    %258 = vmatpush1.msra.mxu0 0.0
    %259 = vmatprep.subr.mxu0 0.0
    %260 = vmatpush1.msra.mxu0 0.0
    %261 = vmatprep.subr.mxu0 0.0
    %262 = vmatpush1.msra.mxu0 0.0
    %263 = vmatprep.subr.mxu0 0.0
    %264 = vmatpush1.msra.mxu0 0.0
    %265 = vmatprep.subr.mxu0 0.0
    %266 = vmatpush1.msra.mxu0 0.0
    %267 = vmatprep.subr.mxu0 0.0
    %268 = vmatpush1.msra.mxu0 0.0
    %269 = vmatprep.subr.mxu0 0.0
    %270 = vmatpush1.msra.mxu0 0.0
    %271 = vmatprep.subr.mxu0 0.0
    %272 = vmatpush1.msra.mxu0 0.0
    %273 = vmatprep.subr.mxu0 0.0
    %274 = vmatpush1.msra.mxu0 0.0
    %275 = vmatprep.subr.mxu0 0.0
    %276 = vmatpush1.msra.mxu0 0.0
    %277 = vmatprep.subr.mxu0 0.0
    %278 = vmatpush1.msra.mxu0 0.0
    %279 = vmatprep.subr.mxu0 0.0
    %280 = vmatpush1.msra.mxu0 0.0
    %281 = vmatprep.subr.mxu0 0.0
    %282 = vmatpush1.msra.mxu0 0.0
    %283 = vmatprep.subr.mxu0 0.0
    %284 = vmatpush1.msra.mxu0 0.0
    %285 = vmatprep.subr.mxu0 0.0
    %286 = vmatpush1.msra.mxu0 0.0
    %287 = vmatprep.subr.mxu0 0.0
    %288 = vmatpush1.msra.mxu0 0.0
    %289 = vmatprep.subr.mxu0 0.0
    %290 = vmatpush1.msra.mxu0 0.0
    %291 = vmatprep.subr.mxu0 0.0
    %292 = vmatpush1.msra.mxu0 0.0
    %293 = vmatprep.subr.mxu0 0.0
    %294 = vmatpush1.msra.mxu0 0.0
    %295 = vmatprep.subr.mxu0 0.0
    %296 = vmatpush1.msra.mxu0 0.0
    %297 = vmatprep.mubr.f32.mxu0 0.0
    %298 = vmatmul.mubr.f32.gmra.mrb[0].mxu0 %v231
    %v299 = vpop.f32.mrb[0].mxu0
    %v300 = vadd.f32 0.0, %v299
    %v301 = vpop.f32.mrb[0].mxu0
    %302 = vdwg.mxu0
    %v304 = vsel %vm205, %v229, 0
    %306 = vmatprep.subr.mxu0 0.0
    %307 = vmatpush1.msra.mxu0 %v44
    %308 = vmatprep.subr.mxu0 0.0
    %309 = vmatpush1.msra.mxu0 %v45
    %310 = vmatprep.subr.mxu0 0.0
    %311 = vmatpush1.msra.mxu0 0.0
    %312 = vmatprep.subr.mxu0 0.0
    %313 = vmatpush1.msra.mxu0 0.0
    %314 = vmatprep.subr.mxu0 0.0
    %315 = vmatpush1.msra.mxu0 0.0
    %316 = vmatprep.subr.mxu0 0.0
    %317 = vmatpush1.msra.mxu0 0.0
    %318 = vmatprep.subr.mxu0 0.0
    %319 = vmatpush1.msra.mxu0 0.0
    %320 = vmatprep.subr.mxu0 0.0
    %321 = vmatpush1.msra.mxu0 0.0
    %322 = vmatprep.subr.mxu0 0.0
    %323 = vmatpush1.msra.mxu0 0.0
    %324 = vmatprep.subr.mxu0 0.0
    %325 = vmatpush1.msra.mxu0 0.0
    %326 = vmatprep.subr.mxu0 0.0
    %327 = vmatpush1.msra.mxu0 0.0
    %328 = vmatprep.subr.mxu0 0.0
    %329 = vmatpush1.msra.mxu0 0.0
    %330 = vmatprep.subr.mxu0 0.0
    %331 = vmatpush1.msra.mxu0 0.0
    %332 = vmatprep.subr.mxu0 0.0
    %333 = vmatpush1.msra.mxu0 0.0
    %334 = vmatprep.subr.mxu0 0.0
    %335 = vmatpush1.msra.mxu0 0.0
    %336 = vmatprep.subr.mxu0 0.0
    %337 = vmatpush1.msra.mxu0 0.0
    %338 = vmatprep.subr.mxu0 0.0
    %339 = vmatpush1.msra.mxu0 0.0
    %340 = vmatprep.subr.mxu0 0.0
    %341 = vmatpush1.msra.mxu0 0.0
    %342 = vmatprep.subr.mxu0 0.0
    %343 = vmatpush1.msra.mxu0 0.0
    %344 = vmatprep.subr.mxu0 0.0
    %345 = vmatpush1.msra.mxu0 0.0
    %346 = vmatprep.subr.mxu0 0.0
    %347 = vmatpush1.msra.mxu0 0.0
    %348 = vmatprep.subr.mxu0 0.0
    %349 = vmatpush1.msra.mxu0 0.0
    %350 = vmatprep.subr.mxu0 0.0
    %351 = vmatpush1.msra.mxu0 0.0
    %352 = vmatprep.subr.mxu0 0.0
    %353 = vmatpush1.msra.mxu0 0.0
    %354 = vmatprep.subr.mxu0 0.0
    %355 = vmatpush1.msra.mxu0 0.0
    %356 = vmatprep.subr.mxu0 0.0
    %357 = vmatpush1.msra.mxu0 0.0
    %358 = vmatprep.subr.mxu0 0.0
    %359 = vmatpush1.msra.mxu0 0.0
    %360 = vmatprep.subr.mxu0 0.0
    %361 = vmatpush1.msra.mxu0 0.0
    %362 = vmatprep.subr.mxu0 0.0
    %363 = vmatpush1.msra.mxu0 0.0
    %364 = vmatprep.subr.mxu0 0.0
    %365 = vmatpush1.msra.mxu0 0.0
    %366 = vmatprep.subr.mxu0 0.0
    %367 = vmatpush1.msra.mxu0 0.0
    %368 = vmatprep.subr.mxu0 0.0
    %369 = vmatpush1.msra.mxu0 0.0
    %370 = vmatprep.mubr.f32.mxu0 0.0
    %371 = vmatmul.mubr.f32.gmra.mrb[0].mxu0 %v304
    %v372 = vpop.f32.mrb[0].mxu0
    %v373 = vadd.f32 0.0, %v372
    %v374 = vpop.f32.mrb[0].mxu0
    %375 = vdwg.mxu0
    %376 = vst.msk [vmem:[#allocation7] sm:$0xff] %vm46, %v300
    %377 = vst.msk [vmem:[#allocation7 + $0x8] sm:$0xff] %vm46, %v373
    // Predicated region
    $region18: #{tpu_custom_call.1} parent=1 // pred_check
      _
    $region19: #{tpu_custom_call.1} parent=1 // pred_check_branch
      %379 = sbr.rel (0) target = $region21
    $region20: #{tpu_custom_call.1} parent=1 // pred_region
      %s381 = ssub.s32 256, 256
      %382 = vsyncadd [#allocation4], %s381
      %s383 = sshll.u32 [#allocation7], 4
      %s384 = int_to_ptr.vmem [resolvable:$true] %s383
      %389 = dma.vmem_to_hbm [thread:$0]  %s384, 256, %s2, [#allocation4], 128, 128, 8
    $region21: #{tpu_custom_call.1} parent=1 // pred_fallthru
      _
    // Predicated region
    $region22: #{tpu_custom_call.1} parent=1 // pred_check
      _
    $region23: #{tpu_custom_call.1} parent=1 // pred_check_branch
      %391 = sbr.rel (0) target = $region25
    $region24: #{tpu_custom_call.1} parent=1 // pred_region
      %392 = dma.done [#allocation4], 256
    $region25: #{tpu_custom_call.1} parent=1 // pred_fallthru
      _
    %393 = vsyncpa [#allocation3], 1
    %394 = vsyncpa [#allocation6], 1
    %395 = vsyncpa [#allocation4], 1

</llo_original>
